<compile_context>
chip_gen: v6e
topology: v6e:2x2x1
jax: 0.10.0
libtpu: 0.0.40
codegen_flags: <defaults>
</compile_context>

<pallas_src>
import math
import jax
import jax.numpy as jnp
from jax.experimental import pallas as pl
from jax.experimental.pallas import tpu as pltpu


def build_pe_table(d_model: int, max_len: int = 152) -> jnp.ndarray:
    """Deterministic sin/cos table, matches the PyTorch buffer pe[:, 0, :]."""
    position = jnp.arange(max_len, dtype=jnp.float32)[:, None]               # [max_len, 1]
    div_term = jnp.exp(
        jnp.arange(0, d_model, 2, dtype=jnp.float32) * (-math.log(10000.0) / d_model)
    )                                                                         # [ceil(d/2)]
    pe = jnp.zeros((max_len, d_model), dtype=jnp.float32)
    pe = pe.at[:, 0::2].set(jnp.sin(position * div_term))
    pe = pe.at[:, 1::2].set(jnp.cos(position * div_term)[:, : d_model // 2])  # even/odd safe
    return pe                                                                 # [max_len, d_model]


def add_pe_kernel(x_ref, pe_ref, o_ref):
    # x_ref: (TS, TC) tile of the flattened input; pe_ref: (1, TC) broadcast row.
    # out[r, c] = x[r, c] + pe[0, c]  -- one row-broadcast add per (large) tile.
    o_ref[...] = (x_ref[...] + pe_ref[...]).astype(o_ref.dtype)


def _vmem_policy():
    """(target_tile_bytes, vmem_limit_cap) gated on TPU generation (physical VMEM size)."""
    phys = None
    try:
        info = pltpu.get_tpu_info()
        phys = getattr(info, "vmem_capacity_bytes", None)
    except Exception:
        phys = None
    if phys is None:
        phys = 64 << 20              # conservative: assume v7x-sized per-core VMEM
    if phys >= (128 << 20):          # v5e / v6e: 128 MiB physical
        return 8 << 20, 64 << 20
    return 6 << 20, 32 << 20         # v7x: 64 MiB per TensorCore


def _sublane(itemsize: int) -> int:
    # Packed-sublane alignment: 8 for 4-byte, 16 for 2-byte, 32 for 1-byte dtypes.
    return max(8, 32 // max(1, itemsize))


def _choose_col_tile(C: int, itemsize: int, sub: int, target_bytes: int) -> int:
    """Lane-axis tile: full width unless even `sub` rows of it would blow the budget."""
    if C <= 128 or sub * C * itemsize <= target_bytes:
        return C
    cols = (target_bytes // (sub * itemsize) // 128) * 128
    return int(min(max(128, cols), C))


def _choose_row_tile(R: int, col_tile_bytes: int, target_bytes: int, sub: int) -> int:
    """Rows per tile: a few MiB per tile, sublane-aligned unless the block is full R."""
    rows = max(1, target_bytes // max(1, col_tile_bytes))
    if rows >= R:
        # Whole array fits in one tile: split into up to 4 sublane-aligned pieces so both
        # megacore TensorCores get >=2 tiles each and pipelining has work to overlap.
        for parts in (4, 2):
            part = R // parts
            if part >= sub and part % sub == 0:
                return part
        return R
    rows = max(sub, (rows // sub) * sub)
    return int(min(rows, R))


def positional_encoding_forward(x: jnp.ndarray, pe_table: jnp.ndarray,
                                *, use_pallas: bool | None = None) -> jnp.ndarray:
    """x: [S, B, D]; pe_table: [max_len, D]. Returns x + pe[:B] broadcast as in PyTorch."""
    S, B, D = x.shape
    max_len = pe_table.shape[0]
    if B > max_len:
        raise ValueError(f"batch size {B} exceeds positional-encoding max_len {max_len}")

    # Lane-dense layout: (b, d) -> column b*D + d, so the broadcast-add is a row-broadcast.
    pe_row = pe_table[:B].astype(x.dtype).reshape(1, B * D)    # [1, B*D], matched dtype

    itemsize = jnp.dtype(x.dtype).itemsize
    total_bytes = S * B * D * itemsize
    if use_pallas is None:
        use_pallas = total_bytes >= (64 << 10)
    if not use_pallas:
        # Tiny input: a standalone pallas_call costs more than it saves; let XLA fuse.
        return x + pe_row.reshape(1, B, D)

    # ---- Lane density: make the flattened last axis an actual multiple of 128. ----
    C = B * D
    R = S
    if C % 128 != 0:
        fold = 128 // math.gcd(C, 128)
        if fold > 1 and S % fold == 0:
            R = S // fold
            C = fold * (B * D)
            pe_row = jnp.tile(pe_row, (1, fold))               # [1, fold*B*D]
        # else: fall back to the un-folded layout (masked edge stores, still correct).
    x2 = x.reshape(R, C)

    # ---- Tile / VMEM policy (generation aware). ----
    target_bytes, vmem_cap = _vmem_policy()
    sub = _sublane(itemsize)
    TC = _choose_col_tile(C, itemsize, sub, target_bytes)
    TS = _choose_row_tile(R, TC * itemsize, target_bytes, sub)
    grid = (pl.cdiv(R, TS), pl.cdiv(C, TC))

    # VMEM budget: 2 pipeline buffers x (x tile + out tile, aliased but budgeted) + pe + headroom.
    tile_bytes = TS * TC * itemsize
    vmem_needed = 2 * 2 * tile_bytes + 2 * TC * itemsize + (1 << 20)
    vmem_limit = int(min(max(vmem_needed, 16 << 20), vmem_cap))

    cost = pl.CostEstimate(
        flops=S * B * D,
        transcendentals=0,
        bytes_accessed=2 * total_bytes + B * D * itemsize,
    )

    out2 = pl.pallas_call(
        add_pe_kernel,
        out_shape=jax.ShapeDtypeStruct((R, C), x.dtype),
        grid=grid,
        in_specs=[
            pl.BlockSpec((TS, TC), lambda i, j: (i, j)),       # lane-dense x tile
            pl.BlockSpec((1, TC), lambda i, j: (0, j)),        # pe row (broadcast over rows)
        ],
        out_specs=pl.BlockSpec((TS, TC), lambda i, j: (i, j)),
        input_output_aliases={0: 0},                           # in-place-safe elementwise add
        cost_estimate=cost,
        compiler_params=pltpu.CompilerParams(
            dimension_semantics=("parallel", "parallel"),
            vmem_limit_bytes=vmem_limit,
        ),
    )(x2, pe_row)
    return out2.reshape(S, B, D)


if __name__ == "__main__":
    # Small shapes consistent with the module's forward: [seq_len, batch, d_model]
    S, B, D = 8, 2, 32
    MAX_LEN = 152

    key = jax.random.PRNGKey(0)
    x = jax.random.normal(key, (S, B, D), dtype=jnp.float32)

    pe_table = build_pe_table(D, MAX_LEN)

    # Force the Pallas path so the kernel itself is exercised (auto-dispatch would
    # route a 2 KiB input to plain JAX).
    out = jax.block_until_ready(positional_encoding_forward(x, pe_table, use_pallas=True))

    # Pure-JAX reference of the exact PyTorch semantics.
    ref = x + pe_table[:B].astype(x.dtype)[None, :, :]
    assert out.shape == (S, B, D)
    assert out.dtype == x.dtype
    assert jnp.allclose(out, ref, atol=1e-6, rtol=1e-6)

    print("KERNEL_OK")
</pallas_src>

<mosaic_0001>
module attributes {stable_mosaic.version = 11 : i64} {
  func.func @add_pe_kernel(%arg0: i32, %arg1: i32, %arg2: memref<4x128xf32, #tpu.memory_space<vmem>>, %arg3: memref<1x128xf32, #tpu.memory_space<vmem>>, %arg4: memref<4x128xf32, #tpu.memory_space<vmem>>) attributes {dimension_semantics = [#tpu.dimension_semantics<parallel>, #tpu.dimension_semantics<parallel>], iteration_bounds = array<i64: 1, 1>, scalar_prefetch = 0 : i64, scratch_operands = 0 : i64, tpu.core_type = #tpu.core_type<tc>, window_params = [{transform_indices = @transform_0, window_bounds = array<i64: 4, 128>}, {transform_indices = @transform_1, window_bounds = array<i64: 1, 128>}, {transform_indices = @transform_2, window_bounds = array<i64: 4, 128>}]} {
    %c0 = arith.constant 0 : index
    %c0_0 = arith.constant 0 : index
    %0 = vector.load %arg2[%c0, %c0_0] : memref<4x128xf32, #tpu.memory_space<vmem>>, vector<4x128xf32>
    %c0_1 = arith.constant 0 : index
    %c0_2 = arith.constant 0 : index
    %1 = vector.load %arg3[%c0_1, %c0_2] : memref<1x128xf32, #tpu.memory_space<vmem>>, vector<1x128xf32>
    %2 = vector.broadcast %1 : vector<1x128xf32> to vector<4x128xf32>
    %3 = arith.addf %0, %2 : vector<4x128xf32>
    %c0_3 = arith.constant 0 : index
    %c0_4 = arith.constant 0 : index
    %4 = vector.load %arg4[%c0_3, %c0_4] : memref<4x128xf32, #tpu.memory_space<vmem>>, vector<4x128xf32>
    tpu.vector_store %arg4[%c0_3, %c0_4], %3 {strides = array<i32>} : memref<4x128xf32, #tpu.memory_space<vmem>>, vector<4x128xf32>,
    return
  }
  func.func @transform_0(%arg0: i32, %arg1: i32) -> (i32, i32) {
    %c0_i32 = arith.constant 0 : i32
    return %arg0, %arg1 : i32, i32
  }
  func.func @transform_1(%arg0: i32, %arg1: i32) -> (i32, i32) {
    %c0_i32 = arith.constant 0 : i32
    %c0_i32_0 = arith.constant 0 : i32
    return %c0_i32, %arg1 : i32, i32
  }
  func.func @transform_2(%arg0: i32, %arg1: i32) -> (i32, i32) {
    %c0_i32 = arith.constant 0 : i32
    return %arg0, %arg1 : i32, i32
  }
}

</mosaic_0001>

<llo_original>
// kernel: tpu_custom_call.1
$region0: #{tpu_custom_call.1}
  #allocation0 [shape = 'u32[]', space=smem, size = 0x4, offset = 0x4, fixed_abs, tag = 'smem constant byte address 0x4 - core index']
  #allocation1 [shape = 'u32[144,128]{1,0:T(1,128)}', space=vmem, size = 0x12000, scoped, tag = 'internal scratch']
  %s0 = inlined_call_operand.hbm [shape: f32[4,128], index: 0, kind: input, shape index: {}, may-alias: {0,2}]
  %s1 = inlined_call_operand.vmem [shape: f32[1,128], index: 1, kind: input, shape index: {}]
  %s2 = inlined_call_operand.hbm [shape: f32[4,128], index: 2, kind: output, shape index: {}, may-alias: {0,2}]
  %s3 = sld [smem:[#allocation0]]
  $region22: #{tpu_custom_call.1} parent=0
    _
  %s5 = ssub.s32 1, %s3
  %s6 = scalar_select 0, %s5, %s3
  $region1: #{tpu_custom_call.1} parent=0
    #allocation2 [shape = 'u8[2048]{0}', space=vmem, size = 0x800, scoped, tag = 'input window, operand 0, single buffered']
    #allocation3 [shape = 's32[1]{0}', space=sflag, size = 0x4, scoped, tag = 'scoped memory for tpu_custom_call.1']
    #allocation4 [shape = 's32[1]{0}', space=sflag, size = 0x4, scoped, tag = 'scoped memory for tpu_custom_call.1']
    #allocation5 [shape = 'u8[2048]{0}', space=vmem, size = 0x800, scoped, tag = 'output window, operand 0, single buffered']
    %7 = vsyncpa [#allocation3], 0
    %8 = vsyncpa [#allocation4], 0
    // Predicated region
    $region2: #{tpu_custom_call.1} parent=1 // pred_check
      _
    $region3: #{tpu_custom_call.1} parent=1 // pred_check_branch
      %10 = sbr.rel (0) target = $region5
    $region4: #{tpu_custom_call.1} parent=1 // pred_region
      %s12 = ssub.s32 64, 64
      %13 = vsyncadd [#allocation3], %s12
      %s15 = sshll.u32 [#allocation2], 4
      %s16 = int_to_ptr.vmem [resolvable:$true] %s15
      %18 = dma.hbm_to_vmem [thread:$0]  %s0, 64, %s16, [#allocation3]
    $region5: #{tpu_custom_call.1} parent=1 // pred_fallthru
      _
    // Predicated region
    $region6: #{tpu_custom_call.1} parent=1 // pred_check
      _
    $region7: #{tpu_custom_call.1} parent=1 // pred_check_branch
      %20 = sbr.rel (0) target = $region9
    $region8: #{tpu_custom_call.1} parent=1 // pred_region
      _
    $region9: #{tpu_custom_call.1} parent=1 // pred_fallthru
      _
    // Predicated region
    $region10: #{tpu_custom_call.1} parent=1 // pred_check
      _
    $region11: #{tpu_custom_call.1} parent=1 // pred_check_branch
      %22 = sbr.rel (0) target = $region13
    $region12: #{tpu_custom_call.1} parent=1 // pred_region
      %23 = dma.done [#allocation3], 64
    $region13: #{tpu_custom_call.1} parent=1 // pred_fallthru
      _
    %v24 = vld [vmem:[#allocation2] sm:$0xf]
    %v25 = vld [vmem:[%s1] sm:$0x1]
    %v27 = vlaneseq
    %v28 = vshrl.u32 %v27, 7
    %v29 = vsub.s32 0, %v28
    %v30 = vrot.slane %v25, %v29
    %v32 = vadd.f32 %v24, %v30
    %33 = vst [vmem:[#allocation5] sm:$0xf] %v32
    // Predicated region
    $region14: #{tpu_custom_call.1} parent=1 // pred_check
      _
    $region15: #{tpu_custom_call.1} parent=1 // pred_check_branch
      %35 = sbr.rel (0) target = $region17
    $region16: #{tpu_custom_call.1} parent=1 // pred_region
      %s37 = ssub.s32 64, 64
      %38 = vsyncadd [#allocation4], %s37
      %s40 = sshll.u32 [#allocation5], 4
      %s41 = int_to_ptr.vmem [resolvable:$true] %s40
      %43 = dma.vmem_to_hbm [thread:$0]  %s41, 64, %s2, [#allocation4]
    $region17: #{tpu_custom_call.1} parent=1 // pred_fallthru
      _
    // Predicated region
    $region18: #{tpu_custom_call.1} parent=1 // pred_check
      _
    $region19: #{tpu_custom_call.1} parent=1 // pred_check_branch
      %45 = sbr.rel (0) target = $region21
    $region20: #{tpu_custom_call.1} parent=1 // pred_region
      %46 = dma.done [#allocation4], 64
    $region21: #{tpu_custom_call.1} parent=1 // pred_fallthru
      _
    %47 = vsyncpa [#allocation3], 1
    %48 = vsyncpa [#allocation4], 1

</llo_original>
